<compile_context>
chip_gen: v6e
topology: v6e:2x2x1
jax: 0.10.0
libtpu: 0.0.40
codegen_flags: <defaults>
</compile_context>

<pallas_src>
import math

import jax
import jax.numpy as jnp
from jax.experimental import pallas as pl
from jax.experimental.pallas import tpu as pltpu


# ----------------------------- Pallas kernel -------------------------------

def _endown_gemm_kernel(w_ref, x_ref, o_ref):
    """One lane-dense GEMM tile of the fused conv.

    w_ref : [Cout, K]   f32   quantized weight, K = 9*Cin (tap-major, chan-minor).
    x_ref : [K, TM]     f32   im2col^T tile, TM columns of M = B*Ho*Wo.
    o_ref : [Cout, TM]  f32   output tile (channel-major, M on lanes).
    """
    o_ref[...] = jnp.dot(w_ref[...], x_ref[...],
                         preferred_element_type=jnp.float32)


# ----------------------------- wrapper --------------------------------------

def _quant_weight(w, k_bits=32):
    """quant_weight: symmetric max quantization.

    At k_bits=32 (the path used by EnDown) w*qmax/max_val exceeds f32's exact
    integer range, so round() is effectively the identity -- which is the
    intended behaviour here.  Do not reuse for k_bits > ~24 without care.
    """
    qmax = 2.0 ** (k_bits - 1) - 1.0
    max_val = jnp.max(jnp.abs(w)) + 1e-8
    return jnp.round(w * qmax / max_val) * max_val / qmax


def en_down_forward(x_nchw, weight_oihw, bits=None, epoch=None):
    """EnDown.forward.  x: [B, Cin, H, W] f32, weight: [Cout, Cin, 3, 3] (torch OIHW)."""
    # TODO(synk): per-sample dynamic-bit path (bits is not None, epoch >= 150).
    del bits, epoch

    x = x_nchw.astype(jnp.float32)
    B, Cin, H, W = x.shape
    Cout = weight_oihw.shape[0]
    KH = KW = 3
    Ho = (H + 2 - KH) // 2 + 1                      # stride 2, pad 1
    Wo = (W + 2 - KW) // 2 + 1
    K = KH * KW * Cin
    M = B * Ho * Wo

    # quant_weight (identity at k_bits=32) + OIHW -> [Cout, 9*Cin] repack, once,
    # outside the kernel.  k index = (i*3 + j)*Cin + c.
    qw = _quant_weight(weight_oihw.astype(jnp.float32))           # [Cout,Cin,3,3]
    w_nk = jnp.transpose(qw, (0, 2, 3, 1)).reshape(Cout, K)       # [Cout, 9*Cin]

    # im2col of the zero-padded input, transposed to [K, M] so the kernel's
    # GEMM writes a channel-major, lane-dense [Cout, M] output (M >= 128).
    x_nhwc = jnp.transpose(x, (0, 2, 3, 1))
    xp = jnp.pad(x_nhwc, ((0, 0), (1, 1), (1, 1), (0, 0)))
    taps = [xp[:, i:i + 2 * Ho - 1:2, j:j + 2 * Wo - 1:2, :]       # [B,Ho,Wo,Cin]
            for i in range(KH) for j in range(KW)]
    x_km = (jnp.stack(taps, axis=0)                                # [9,B,Ho,Wo,Cin]
              .transpose(0, 4, 1, 2, 3)                            # [9,Cin,B,Ho,Wo]
              .reshape(K, M))

    # Tile M (the lane dim).  Keep the grid short -- it is a serial loop on
    # v5e/v6e -- but parallelisable (dimension_semantics) when M grows.
    TM = 128 if M <= 512 else 512
    M_pad = ((M + TM - 1) // TM) * TM
    if M_pad != M:
        x_km = jnp.pad(x_km, ((0, 0), (0, M_pad - M)))
    grid = (M_pad // TM,)

    cost = pl.CostEstimate(
        flops=2 * Cout * K * M_pad,
        bytes_accessed=4 * (Cout * K + K * M_pad + Cout * M_pad),
        transcendentals=0,
    )

    out = pl.pallas_call(
        _endown_gemm_kernel,
        out_shape=jax.ShapeDtypeStruct((Cout, M_pad), jnp.float32),
        grid=grid,
        in_specs=[
            pl.BlockSpec((Cout, K), lambda m: (0, 0)),    # constant weight block
            pl.BlockSpec((K, TM), lambda m: (0, m)),      # im2col^T column strip
        ],
        out_specs=pl.BlockSpec((Cout, TM), lambda m: (0, m)),
        compiler_params=pltpu.CompilerParams(
            dimension_semantics=("parallel",),
            vmem_limit_bytes=32 * 1024 * 1024,
        ),
        cost_estimate=cost,
    )(w_nk, x_km)

    # [Cout, M] -> [B, Cout, Ho, Wo]  (channel-major GEMM output: no big
    # NHWC->NCHW transpose needed, just the batch/channel axis swap).
    out = out[:, :M].reshape(Cout, B, Ho, Wo)
    return jnp.transpose(out, (1, 0, 2, 3))


# ----------------------------- parameter init -------------------------------

def init_endown_params(key, in_channels, out_channels):
    """QuantConv2d.reset_parameters: U(-1/sqrt(n), 1/sqrt(n)), no bias."""
    n = in_channels * 3 * 3
    stdv = 1.0 / math.sqrt(n)
    w = jax.random.uniform(key, (out_channels, in_channels, 3, 3),
                           jnp.float32, -stdv, stdv)
    return {"conv": {"w": w}}


# ----------------------------- main ------------------------------------------

if __name__ == "__main__":
    key = jax.random.PRNGKey(0)
    k_w, k_x = jax.random.split(key)

    # EnDown1 configuration of the parent Unet (base_channels=16): 16 -> 32.
    B, Cin, Cout, H, W = 2, 16, 32, 16, 16
    params = init_endown_params(k_w, Cin, Cout)
    x = jax.random.normal(k_x, (B, Cin, H, W), dtype=jnp.float32)

    fwd = jax.jit(en_down_forward)
    y = fwd(x, params["conv"]["w"])
    jax.block_until_ready(y)

    assert y.shape == (B, Cout, H // 2, W // 2)
    assert bool(jnp.all(jnp.isfinite(y)))

    # Cross-check against XLA's conv (f32 MXU operands => tight tolerance).
    qw = _quant_weight(params["conv"]["w"])
    ref = jax.lax.conv_general_dilated(
        x, qw, window_strides=(2, 2), padding=((1, 1), (1, 1)),
        dimension_numbers=("NCHW", "OIHW", "NCHW"),
        precision=jax.lax.Precision.HIGHEST)
    max_err = float(jnp.max(jnp.abs(y - ref)))
    assert max_err < 1e-2, f"max abs error vs reference conv: {max_err}"

    print("KERNEL_OK")
</pallas_src>

<mosaic_0001>
module attributes {stable_mosaic.version = 11 : i64} {
  func.func @_endown_gemm_kernel(%arg0: i32, %arg1: memref<32x144xf32, #tpu.memory_space<vmem>>, %arg2: memref<144x128xf32, #tpu.memory_space<vmem>>, %arg3: memref<32x128xf32, #tpu.memory_space<vmem>>) attributes {dimension_semantics = [#tpu.dimension_semantics<parallel>], iteration_bounds = array<i64: 1>, scalar_prefetch = 0 : i64, scratch_operands = 0 : i64, tpu.core_type = #tpu.core_type<tc>, window_params = [{pipeline_mode = #tpu.pipeline_mode<synchronous>, transform_indices = @transform_0, window_bounds = array<i64: 32, 144>}, {transform_indices = @transform_1, window_bounds = array<i64: 144, 128>}, {transform_indices = @transform_2, window_bounds = array<i64: 32, 128>}]} {
    %c0 = arith.constant 0 : index
    %c0_0 = arith.constant 0 : index
    %0 = vector.load %arg1[%c0, %c0_0] : memref<32x144xf32, #tpu.memory_space<vmem>>, vector<32x144xf32>
    %c0_1 = arith.constant 0 : index
    %c0_2 = arith.constant 0 : index
    %1 = vector.load %arg2[%c0_1, %c0_2] : memref<144x128xf32, #tpu.memory_space<vmem>>, vector<144x128xf32>
    %cst = arith.constant dense<0.000000e+00> : vector<32x128xf32>
    %2 = tpu.matmul %0, %1, %cst {dimension_numbers = #tpu.dot_dimension_numbers<[1], [0], [0], [1], [0, 0, 1, 1], [], []>} : vector<32x144xf32>, vector<144x128xf32>, vector<32x128xf32> -> vector<32x128xf32>
    %c0_3 = arith.constant 0 : index
    %c0_4 = arith.constant 0 : index
    %3 = vector.load %arg3[%c0_3, %c0_4] : memref<32x128xf32, #tpu.memory_space<vmem>>, vector<32x128xf32>
    tpu.vector_store %arg3[%c0_3, %c0_4], %2 {strides = array<i32>} : memref<32x128xf32, #tpu.memory_space<vmem>>, vector<32x128xf32>,
    return
  }
  func.func @transform_0(%arg0: i32) -> (i32, i32) {
    %c0_i32 = arith.constant 0 : i32
    %c0_i32_0 = arith.constant 0 : i32
    %c0_i32_1 = arith.constant 0 : i32
    return %c0_i32, %c0_i32_0 : i32, i32
  }
  func.func @transform_1(%arg0: i32) -> (i32, i32) {
    %c0_i32 = arith.constant 0 : i32
    %c0_i32_0 = arith.constant 0 : i32
    return %c0_i32, %arg0 : i32, i32
  }
  func.func @transform_2(%arg0: i32) -> (i32, i32) {
    %c0_i32 = arith.constant 0 : i32
    %c0_i32_0 = arith.constant 0 : i32
    return %c0_i32, %arg0 : i32, i32
  }
}

</mosaic_0001>

<llo_original>
// kernel: en_down_forward.1
$region0: #{en_down_forward.1}
  #allocation0 [shape = 'u32[]', space=smem, size = 0x4, offset = 0x4, fixed_abs, tag = 'smem constant byte address 0x4 - core index']
  #allocation1 [shape = 'u32[144,128]{1,0:T(1,128)}', space=vmem, size = 0x12000, scoped, tag = 'internal scratch']
  %s0 = inlined_call_operand.vmem [shape: f32[32,144], index: 0, kind: input, shape index: {}]
  %s1 = inlined_call_operand.vmem [shape: f32[144,128], index: 1, kind: input, shape index: {}]
  %s2 = inlined_call_operand.vmem [shape: f32[32,128], index: 2, kind: output, shape index: {}]
  %s3 = sld [smem:[#allocation0]]
  $region18: #{en_down_forward.1} parent=0
    _
  %s5 = ssub.s32 1, %s3
  %s6 = scalar_select 0, %s5, %s3
  // Predicated region
  $region2: #{en_down_forward.1} parent=0 // pred_check
    _
  $region3: #{en_down_forward.1} parent=0 // pred_check_branch
    %8 = sbr.rel (0) target = $region5
  $region4: #{en_down_forward.1} parent=0 // pred_region
    _
  $region5: #{en_down_forward.1} parent=0 // pred_fallthru
    _
  // Predicated region
  $region6: #{en_down_forward.1} parent=0 // pred_check
    _
  $region7: #{en_down_forward.1} parent=0 // pred_check_branch
    %10 = sbr.rel (0) target = $region9
  $region8: #{en_down_forward.1} parent=0 // pred_region
    _
  $region9: #{en_down_forward.1} parent=0 // pred_fallthru
    _
  %v11 = vld [vmem:[%s0] sm:$0xff]
  %v12 = vld [vmem:[%s0 + $0x8] sm:$0xff]
  %v13 = vld [vmem:[%s0 + $0x10] sm:$0xff]
  %v14 = vld [vmem:[%s0 + $0x18] sm:$0xff]
  %v15 = vld [vmem:[%s0 + $0x20] sm:$0xff]
  %v16 = vld [vmem:[%s0 + $0x28] sm:$0xff]
  %v17 = vld [vmem:[%s0 + $0x30] sm:$0xff]
  %v18 = vld [vmem:[%s0 + $0x38] sm:$0xff]
  %v19 = vld [vmem:[%s1] sm:$0xff]
  %v20 = vld [vmem:[%s1 + $0x8] sm:$0xff]
  %v21 = vld [vmem:[%s1 + $0x10] sm:$0xff]
  %v22 = vld [vmem:[%s1 + $0x18] sm:$0xff]
  %v23 = vld [vmem:[%s1 + $0x20] sm:$0xff]
  %v24 = vld [vmem:[%s1 + $0x28] sm:$0xff]
  %v25 = vld [vmem:[%s1 + $0x30] sm:$0xff]
  %v26 = vld [vmem:[%s1 + $0x38] sm:$0xff]
  %v27 = vld [vmem:[%s1 + $0x40] sm:$0xff]
  %v28 = vld [vmem:[%s1 + $0x48] sm:$0xff]
  %v29 = vld [vmem:[%s1 + $0x50] sm:$0xff]
  %v30 = vld [vmem:[%s1 + $0x58] sm:$0xff]
  %v31 = vld [vmem:[%s1 + $0x60] sm:$0xff]
  %v32 = vld [vmem:[%s1 + $0x68] sm:$0xff]
  %v33 = vld [vmem:[%s1 + $0x70] sm:$0xff]
  %v34 = vld [vmem:[%s1 + $0x78] sm:$0xff]
  %v35 = vld [vmem:[%s1 + $0x80] sm:$0xff]
  %v36 = vld [vmem:[%s1 + $0x88] sm:$0xff]
  %vm37 = vcmask 130048
  %v39 = vsel %vm37, %v12, 0
  %v42 = vsel %vm37, %v14, 0
  %v45 = vsel %vm37, %v16, 0
  %v48 = vsel %vm37, %v18, 0
  %50 = vmatprep.subr.mxu0 0.0
  %51 = vmatpush1.msra.mxu0 %v34
  %52 = vmatprep.subr.mxu0 0.0
  %53 = vmatpush1.msra.mxu0 %v33
  %54 = vmatprep.subr.mxu0 0.0
  %55 = vmatpush1.msra.mxu0 %v32
  %56 = vmatprep.subr.mxu0 0.0
  %57 = vmatpush1.msra.mxu0 %v31
  %58 = vmatprep.subr.mxu0 0.0
  %59 = vmatpush1.msra.mxu0 %v30
  %60 = vmatprep.subr.mxu0 0.0
  %61 = vmatpush1.msra.mxu0 %v29
  %62 = vmatprep.subr.mxu0 0.0
  %63 = vmatpush1.msra.mxu0 %v28
  %64 = vmatprep.subr.mxu0 0.0
  %65 = vmatpush1.msra.mxu0 %v27
  %66 = vmatprep.subr.mxu0 0.0
  %67 = vmatpush1.msra.mxu0 %v26
  %68 = vmatprep.subr.mxu0 0.0
  %69 = vmatpush1.msra.mxu0 %v25
  %70 = vmatprep.subr.mxu0 0.0
  %71 = vmatpush1.msra.mxu0 %v24
  %72 = vmatprep.subr.mxu0 0.0
  %73 = vmatpush1.msra.mxu0 %v23
  %74 = vmatprep.subr.mxu0 0.0
  %75 = vmatpush1.msra.mxu0 %v22
  %76 = vmatprep.subr.mxu0 0.0
  %77 = vmatpush1.msra.mxu0 %v21
  %78 = vmatprep.subr.mxu0 0.0
  %79 = vmatpush1.msra.mxu0 %v20
  %80 = vmatprep.subr.mxu0 0.0
  %81 = vmatpush1.msra.mxu0 %v19
  %82 = vmatprep.subr.mxu0 0.0
  %83 = vmatpush2.msra.mxu0 0.0
  %84 = vmatprep.subr.mxu0 0.0
  %85 = vmatpush2.msra.mxu0 0.0
  %86 = vmatprep.subr.mxu0 0.0
  %87 = vmatpush2.msra.mxu0 0.0
  %88 = vmatprep.subr.mxu0 0.0
  %89 = vmatpush2.msra.mxu0 0.0
  %90 = vmatprep.subr.mxu0 0.0
  %91 = vmatpush2.msra.mxu0 0.0
  %92 = vmatprep.subr.mxu0 0.0
  %93 = vmatpush2.msra.mxu0 0.0
  %94 = vmatprep.subr.mxu0 0.0
  %95 = vmatpush2.msra.mxu0 0.0
  %96 = vmatprep.subr.mxu0 0.0
  %97 = vmatpush2.msra.mxu0 0.0
  %98 = vmatprep.subr.mxu0 0.0
  %99 = vmatpush2.msra.mxu0 0.0
  %100 = vmatprep.subr.mxu0 0.0
  %101 = vmatpush2.msra.mxu0 0.0
  %102 = vmatprep.subr.mxu0 0.0
  %103 = vmatpush2.msra.mxu0 0.0
  %104 = vmatprep.subr.mxu0 0.0
  %105 = vmatpush2.msra.mxu0 0.0
  %106 = vmatprep.subr.mxu0 0.0
  %107 = vmatpush2.msra.mxu0 0.0
  %108 = vmatprep.subr.mxu0 0.0
  %109 = vmatpush2.msra.mxu0 0.0
  %110 = vmatprep.subr.mxu0 0.0
  %111 = vmatpush2.msra.mxu0 %v36
  %112 = vmatprep.subr.mxu0 0.0
  %113 = vmatpush2.msra.mxu0 %v35
  %114 = vmatprep.mubr.f32.mxu0 %v39
  %115 = vmatmul.mubr.f32.gmra.mxu0 %v11
  %v116 = vpop.f32.mrf.mxu0
  %v117 = vadd.f32 0.0, %v116
  %v118 = vpop.f32.mrf.mxu0
  %119 = vmatprep.mubr.f32.mxu0 %v42
  %120 = vmatmul.mubr.f32.gmra.mxu0 %v13
  %v121 = vpop.f32.mrf.mxu0
  %v122 = vadd.f32 0.0, %v121
  %v123 = vpop.f32.mrf.mxu0
  %124 = vmatprep.mubr.f32.mxu0 %v45
  %125 = vmatmul.mubr.f32.gmra.mxu0 %v15
  %v126 = vpop.f32.mrf.mxu0
  %v127 = vadd.f32 0.0, %v126
  %v128 = vpop.f32.mrf.mxu0
  %129 = vmatprep.mubr.f32.mxu0 %v48
  %130 = vmatmul.mubr.f32.gmra.mxu0 %v17
  %v131 = vpop.f32.mrf.mxu0
  %v132 = vadd.f32 0.0, %v131
  %v133 = vpop.f32.mrf.mxu0
  %134 = vdwg.mxu0
  %135 = vst [vmem:[%s2] sm:$0xff] %v117
  %136 = vst [vmem:[%s2 + $0x8] sm:$0xff] %v122
  %137 = vst [vmem:[%s2 + $0x10] sm:$0xff] %v127
  %138 = vst [vmem:[%s2 + $0x18] sm:$0xff] %v132
  // Predicated region
  $region10: #{en_down_forward.1} parent=0 // pred_check
    _
  $region11: #{en_down_forward.1} parent=0 // pred_check_branch
    %140 = sbr.rel (0) target = $region13
  $region12: #{en_down_forward.1} parent=0 // pred_region
    _
  $region13: #{en_down_forward.1} parent=0 // pred_fallthru
    _
  // Predicated region
  $region14: #{en_down_forward.1} parent=0 // pred_check
    _
  $region15: #{en_down_forward.1} parent=0 // pred_check_branch
    %142 = sbr.rel (0) target = $region17
  $region16: #{en_down_forward.1} parent=0 // pred_region
    _
  $region17: #{en_down_forward.1} parent=0 // pred_fallthru
    _

</llo_original>
